<compile_context>
chip_gen: v5e
topology: v5e:2x2
jax: 0.10.0
libtpu: 0.0.40
codegen_flags: <defaults>
</compile_context>

<pallas_src>
import functools

import jax
import jax.numpy as jnp
import numpy as np
from jax.experimental import pallas as pl
from jax.experimental.pallas import tpu as pltpu


def _vote_kernel(feat_ref, w1_ref, b1_ref, w2_ref, b2_ref, w3_ref, b3_ref,
                 vfeat_ref, off_ref, *, num_seed, vote_factor, out_dim):
    """Per-batch hot path, channels-first: 3 lane-dense matmuls + ReLUs + adds."""
    x = feat_ref[0]                                           # (C, N)

    # conv1 (+ folded bn1) + relu
    h = jnp.dot(w1_ref[...], x, preferred_element_type=jnp.float32) + b1_ref[...]
    h = jnp.maximum(h, 0.0)
    # conv2 (+ folded bn2) + relu
    h = jnp.dot(w2_ref[...], h, preferred_element_type=jnp.float32) + b2_ref[...]
    h = jnp.maximum(h, 0.0)
    # conv3, fused (residual rows first, then xyz-offset rows)
    o3 = jnp.dot(w3_ref[...], h, preferred_element_type=jnp.float32) + b3_ref[...]

    n_res = vote_factor * out_dim
    res = o3[:n_res]                                          # (VF*C, N), 8-aligned slice
    # vote features, vote-major: [v, c, n] = x[c, n] + residual[v, c, n]
    vfeat_ref[0] = x[None, :, :] + res.reshape(vote_factor, out_dim, num_seed)
    # raw xyz-offset slab, lane-dense: [v*3+j, n]
    off_ref[0] = o3[n_res:]                                   # (VF*3, N)


@functools.partial(jax.jit, static_argnums=(3,))
def votepose_voting(seed_xyz, seed_features, params, vote_factor):
    """seed_xyz: (B, N, 3); seed_features: (B, C, N)  ->
       vote_xyz: (B, N*VF, 3); vote_features: (B, C, N*VF)"""
    B, N, _ = seed_xyz.shape
    C = seed_features.shape[1]
    VF = vote_factor
    NV = N * VF
    eps = 1e-5

    # --- glue: fold eval-mode BN into conv1/conv2, permute conv3 rows -------
    w1, b1 = params["w1"], params["b1"]                       # (C, C), (C,)
    w2, b2 = params["w2"], params["b2"]
    w3, b3 = params["w3"], params["b3"]                       # ((3+C)*VF, C), ((3+C)*VF,)

    s1 = params["bn1_gamma"] / jnp.sqrt(params["bn1_var"] + eps)
    w1f = s1[:, None] * w1                                    # (C_out, C_in), no transpose
    b1f = (s1 * (b1 - params["bn1_mean"]) + params["bn1_beta"])[:, None]   # (C, 1)

    s2 = params["bn2_gamma"] / jnp.sqrt(params["bn2_var"] + eps)
    w2f = s2[:, None] * w2
    b2f = (s2 * (b2 - params["bn2_mean"]) + params["bn2_beta"])[:, None]

    idx_ft = np.asarray([k * (3 + C) + 3 + j for k in range(VF) for j in range(C)])
    idx_xyz = np.asarray([k * (3 + C) + j for k in range(VF) for j in range(3)])
    w3p = jnp.concatenate([w3[idx_ft], w3[idx_xyz]], axis=0)  # (VF*(3+C), C)
    b3p = jnp.concatenate([b3[idx_ft], b3[idx_xyz]], axis=0)[:, None]

    kernel = functools.partial(_vote_kernel, num_seed=N, vote_factor=VF, out_dim=C)

    full2 = lambda r, c: pl.BlockSpec((r, c), lambda b: (0, 0))

    vfeat_raw, off_raw = pl.pallas_call(
        kernel,
        out_shape=(jax.ShapeDtypeStruct((B, VF, C, N), jnp.float32),
                   jax.ShapeDtypeStruct((B, VF * 3, N), jnp.float32)),
        grid_spec=pltpu.PrefetchScalarGridSpec(
            num_scalar_prefetch=0,
            grid=(B,),
            in_specs=[
                pl.BlockSpec((1, C, N), lambda b: (b, 0, 0)),  # seed_features, native (C, N)
                full2(C, C), full2(C, 1),                      # conv1 + bn1 folded
                full2(C, C), full2(C, 1),                      # conv2 + bn2 folded
                full2(VF * (3 + C), C), full2(VF * (3 + C), 1),  # fused conv3
            ],
            out_specs=[
                pl.BlockSpec((1, VF, C, N), lambda b: (b, 0, 0, 0)),
                pl.BlockSpec((1, VF * 3, N), lambda b: (b, 0, 0)),
            ],
        ),
        compiler_params=pltpu.CompilerParams(dimension_semantics=("parallel",)),
    )(seed_features, w1f, b1f, w2f, b2f, w3p, b3p)

    # --- tiny layout glue (fused by XLA inside this jit) ---------------------
    # vote_features: (B, VF, C, N) -> (B, C, N, VF) -> (B, C, N*VF), vote-minor
    vote_features = jnp.transpose(vfeat_raw, (0, 2, 3, 1)).reshape(B, C, NV)
    # vote_xyz: add seed_xyz to the (B, VF, 3, N) offset slab, reorder to (B, N*VF, 3)
    off = jnp.transpose(off_raw.reshape(B, VF, 3, N), (0, 3, 1, 2))  # (B, N, VF, 3)
    vote_xyz = (seed_xyz[:, :, None, :] + off).reshape(B, NV, 3)
    return vote_xyz, vote_features


def _reference(seed_xyz, seed_features, params, vote_factor):
    """Pure-JAX reference matching the PyTorch forward (eval-mode BN)."""
    eps = 1e-5
    B, N, _ = seed_xyz.shape
    C = seed_features.shape[1]
    VF = vote_factor

    def conv1d(x, w, b):                              # x: (B, C_in, N)
        return jnp.einsum("oc,bcn->bon", w, x) + b[None, :, None]

    def bn(x, g, bta, m, v):
        return g[None, :, None] * (x - m[None, :, None]) / jnp.sqrt(v[None, :, None] + eps) + bta[None, :, None]

    net = jax.nn.relu(bn(conv1d(seed_features, params["w1"], params["b1"]),
                         params["bn1_gamma"], params["bn1_beta"], params["bn1_mean"], params["bn1_var"]))
    net = jax.nn.relu(bn(conv1d(net, params["w2"], params["b2"]),
                         params["bn2_gamma"], params["bn2_beta"], params["bn2_mean"], params["bn2_var"]))
    net = conv1d(net, params["w3"], params["b3"])     # (B, (3+C)*VF, N)
    net = jnp.transpose(net, (0, 2, 1)).reshape(B, N, VF, 3 + C)
    offset = net[:, :, :, 0:3]
    vote_xyz = (seed_xyz[:, :, None, :] + offset).reshape(B, N * VF, 3)
    residual = net[:, :, :, 3:]
    vote_features = (jnp.transpose(seed_features, (0, 2, 1))[:, :, None, :] + residual)
    vote_features = vote_features.reshape(B, N * VF, C)
    vote_features = jnp.transpose(vote_features, (0, 2, 1))
    return vote_xyz, vote_features


def _init_params(key, C, VF):
    ks = jax.random.split(key, 6)
    out3 = (3 + C) * VF
    p = {
        "w1": 0.1 * jax.random.normal(ks[0], (C, C), jnp.float32),
        "b1": 0.1 * jax.random.normal(ks[1], (C,), jnp.float32),
        "w2": 0.1 * jax.random.normal(ks[2], (C, C), jnp.float32),
        "b2": 0.1 * jax.random.normal(ks[3], (C,), jnp.float32),
        "w3": 0.1 * jax.random.normal(ks[4], (out3, C), jnp.float32),
        "b3": 0.1 * jax.random.normal(ks[5], (out3,), jnp.float32),
        # BatchNorm parameters / running stats (eval mode), deterministic:
        "bn1_gamma": jnp.linspace(0.8, 1.2, C, dtype=jnp.float32),
        "bn1_beta": jnp.linspace(-0.1, 0.1, C, dtype=jnp.float32),
        "bn1_mean": jnp.linspace(-0.05, 0.05, C, dtype=jnp.float32),
        "bn1_var": jnp.linspace(0.9, 1.1, C, dtype=jnp.float32),
        "bn2_gamma": jnp.linspace(1.1, 0.9, C, dtype=jnp.float32),
        "bn2_beta": jnp.linspace(0.1, -0.1, C, dtype=jnp.float32),
        "bn2_mean": jnp.linspace(0.05, -0.05, C, dtype=jnp.float32),
        "bn2_var": jnp.linspace(1.1, 0.9, C, dtype=jnp.float32),
    }
    return p


if __name__ == "__main__":
    key = jax.random.PRNGKey(0)
    B, C, N, VF = 2, 32, 128, 2                      # batch, seed_feature_dim, num_seed, vote_factor

    k_xyz, k_feat, k_par = jax.random.split(key, 3)
    seed_xyz = jax.random.normal(k_xyz, (B, N, 3), jnp.float32)
    seed_features = jax.random.normal(k_feat, (B, C, N), jnp.float32)
    params = _init_params(k_par, C, VF)

    vote_xyz, vote_features = votepose_voting(seed_xyz, seed_features, params, VF)
    jax.block_until_ready((vote_xyz, vote_features))

    ref_xyz, ref_feat = _reference(seed_xyz, seed_features, params, VF)
    assert vote_xyz.shape == (B, N * VF, 3)
    assert vote_features.shape == (B, C, N * VF)
    assert jnp.allclose(vote_xyz, ref_xyz, atol=1e-4, rtol=1e-4)
    assert jnp.allclose(vote_features, ref_feat, atol=1e-4, rtol=1e-4)

    print("KERNEL_OK")
</pallas_src>

<mosaic_0001>
module attributes {stable_mosaic.version = 11 : i64} {
  func.func @_vote_kernel(%arg0: i32, %arg1: memref<1x32x128xf32, #tpu.memory_space<vmem>>, %arg2: memref<32x32xf32, #tpu.memory_space<vmem>>, %arg3: memref<32x1xf32, #tpu.memory_space<vmem>>, %arg4: memref<32x32xf32, #tpu.memory_space<vmem>>, %arg5: memref<32x1xf32, #tpu.memory_space<vmem>>, %arg6: memref<70x32xf32, #tpu.memory_space<vmem>>, %arg7: memref<70x1xf32, #tpu.memory_space<vmem>>, %arg8: memref<1x2x32x128xf32, #tpu.memory_space<vmem>>, %arg9: memref<1x6x128xf32, #tpu.memory_space<vmem>>) attributes {dimension_semantics = [#tpu.dimension_semantics<parallel>], iteration_bounds = array<i64: 2>, scalar_prefetch = 0 : i64, scratch_operands = 0 : i64, tpu.core_type = #tpu.core_type<tc>, window_params = [{transform_indices = @transform_0, window_bounds = array<i64: 1, 32, 128>}, {pipeline_mode = #tpu.pipeline_mode<synchronous>, transform_indices = @transform_1, window_bounds = array<i64: 32, 32>}, {pipeline_mode = #tpu.pipeline_mode<synchronous>, transform_indices = @transform_2, window_bounds = array<i64: 32, 1>}, {pipeline_mode = #tpu.pipeline_mode<synchronous>, transform_indices = @transform_3, window_bounds = array<i64: 32, 32>}, {pipeline_mode = #tpu.pipeline_mode<synchronous>, transform_indices = @transform_4, window_bounds = array<i64: 32, 1>}, {pipeline_mode = #tpu.pipeline_mode<synchronous>, transform_indices = @transform_5, window_bounds = array<i64: 70, 32>}, {pipeline_mode = #tpu.pipeline_mode<synchronous>, transform_indices = @transform_6, window_bounds = array<i64: 70, 1>}, {transform_indices = @transform_7, window_bounds = array<i64: 1, 2, 32, 128>}, {transform_indices = @transform_8, window_bounds = array<i64: 1, 6, 128>}]} {
    %c0 = arith.constant 0 : index
    %c0_0 = arith.constant 0 : index
    %c0_1 = arith.constant 0 : index
    %0 = vector.load %arg1[%c0, %c0_0, %c0_1] : memref<1x32x128xf32, #tpu.memory_space<vmem>>, vector<1x32x128xf32>
    %1 = vector.shape_cast %0 : vector<1x32x128xf32> to vector<32x128xf32>
    %c0_2 = arith.constant 0 : index
    %c0_3 = arith.constant 0 : index
    %2 = vector.load %arg2[%c0_2, %c0_3] : memref<32x32xf32, #tpu.memory_space<vmem>>, vector<32x32xf32>
    %cst = arith.constant dense<0.000000e+00> : vector<32x128xf32>
    %3 = tpu.matmul %2, %1, %cst {dimension_numbers = #tpu.dot_dimension_numbers<[1], [0], [0], [1], [0, 0, 1, 1], [], []>} : vector<32x32xf32>, vector<32x128xf32>, vector<32x128xf32> -> vector<32x128xf32>
    %c0_4 = arith.constant 0 : index
    %c0_5 = arith.constant 0 : index
    %4 = vector.load %arg3[%c0_4, %c0_5] : memref<32x1xf32, #tpu.memory_space<vmem>>, vector<32x1xf32>
    %5 = vector.broadcast %4 : vector<32x1xf32> to vector<32x128xf32>
    %6 = arith.addf %3, %5 : vector<32x128xf32>
    %cst_6 = arith.constant 0.000000e+00 : f32
    %7 = vector.broadcast %cst_6 : f32 to vector<32x128xf32>
    %8 = arith.maximumf %6, %7 : vector<32x128xf32>
    %c0_7 = arith.constant 0 : index
    %c0_8 = arith.constant 0 : index
    %9 = vector.load %arg4[%c0_7, %c0_8] : memref<32x32xf32, #tpu.memory_space<vmem>>, vector<32x32xf32>
    %cst_9 = arith.constant dense<0.000000e+00> : vector<32x128xf32>
    %10 = tpu.matmul %9, %8, %cst_9 {dimension_numbers = #tpu.dot_dimension_numbers<[1], [0], [0], [1], [0, 0, 1, 1], [], []>} : vector<32x32xf32>, vector<32x128xf32>, vector<32x128xf32> -> vector<32x128xf32>
    %c0_10 = arith.constant 0 : index
    %c0_11 = arith.constant 0 : index
    %11 = vector.load %arg5[%c0_10, %c0_11] : memref<32x1xf32, #tpu.memory_space<vmem>>, vector<32x1xf32>
    %12 = vector.broadcast %11 : vector<32x1xf32> to vector<32x128xf32>
    %13 = arith.addf %10, %12 : vector<32x128xf32>
    %cst_12 = arith.constant 0.000000e+00 : f32
    %14 = vector.broadcast %cst_12 : f32 to vector<32x128xf32>
    %15 = arith.maximumf %13, %14 : vector<32x128xf32>
    %c0_13 = arith.constant 0 : index
    %c0_14 = arith.constant 0 : index
    %16 = vector.load %arg6[%c0_13, %c0_14] : memref<70x32xf32, #tpu.memory_space<vmem>>, vector<70x32xf32>
    %cst_15 = arith.constant dense<0.000000e+00> : vector<70x128xf32>
    %17 = tpu.matmul %16, %15, %cst_15 {dimension_numbers = #tpu.dot_dimension_numbers<[1], [0], [0], [1], [0, 0, 1, 1], [], []>} : vector<70x32xf32>, vector<32x128xf32>, vector<70x128xf32> -> vector<70x128xf32>
    %c0_16 = arith.constant 0 : index
    %c0_17 = arith.constant 0 : index
    %18 = vector.load %arg7[%c0_16, %c0_17] : memref<70x1xf32, #tpu.memory_space<vmem>>, vector<70x1xf32>
    %19 = vector.broadcast %18 : vector<70x1xf32> to vector<70x128xf32>
    %20 = arith.addf %17, %19 : vector<70x128xf32>
    %21 = vector.extract_strided_slice %20 {offsets = [0, 0], sizes = [64, 128], strides = [1, 1]} : vector<70x128xf32> to vector<64x128xf32>
    %22 = vector.shape_cast %1 : vector<32x128xf32> to vector<1x32x128xf32>
    %23 = vector.shape_cast %21 : vector<64x128xf32> to vector<2x32x128xf32>
    %24 = vector.broadcast %22 : vector<1x32x128xf32> to vector<2x32x128xf32>
    %25 = arith.addf %24, %23 : vector<2x32x128xf32>
    %c0_18 = arith.constant 0 : index
    %c0_19 = arith.constant 0 : index
    %c0_20 = arith.constant 0 : index
    %c0_21 = arith.constant 0 : index
    %26 = vector.load %arg8[%c0_18, %c0_19, %c0_20, %c0_21] : memref<1x2x32x128xf32, #tpu.memory_space<vmem>>, vector<1x2x32x128xf32>
    %27 = vector.shape_cast %26 : vector<1x2x32x128xf32> to vector<2x32x128xf32>
    %28 = vector.shape_cast %25 : vector<2x32x128xf32> to vector<1x2x32x128xf32>
    tpu.vector_store %arg8[%c0_18, %c0_19, %c0_20, %c0_21], %28 {strides = array<i32>} : memref<1x2x32x128xf32, #tpu.memory_space<vmem>>, vector<1x2x32x128xf32>,
    %29 = vector.extract_strided_slice %20 {offsets = [64, 0], sizes = [6, 128], strides = [1, 1]} : vector<70x128xf32> to vector<6x128xf32>
    %c0_22 = arith.constant 0 : index
    %c0_23 = arith.constant 0 : index
    %c0_24 = arith.constant 0 : index
    %30 = vector.load %arg9[%c0_22, %c0_23, %c0_24] : memref<1x6x128xf32, #tpu.memory_space<vmem>>, vector<1x6x128xf32>
    %31 = vector.shape_cast %30 : vector<1x6x128xf32> to vector<6x128xf32>
    %32 = vector.shape_cast %29 : vector<6x128xf32> to vector<1x6x128xf32>
    tpu.vector_store %arg9[%c0_22, %c0_23, %c0_24], %32 {strides = array<i32>} : memref<1x6x128xf32, #tpu.memory_space<vmem>>, vector<1x6x128xf32>,
    return
  }
  func.func @transform_0(%arg0: i32) -> (i32, i32, i32) {
    %c0_i32 = arith.constant 0 : i32
    %c0_i32_0 = arith.constant 0 : i32
    %c0_i32_1 = arith.constant 0 : i32
    return %arg0, %c0_i32, %c0_i32_0 : i32, i32, i32
  }
  func.func @transform_1(%arg0: i32) -> (i32, i32) {
    %c0_i32 = arith.constant 0 : i32
    %c0_i32_0 = arith.constant 0 : i32
    %c0_i32_1 = arith.constant 0 : i32
    return %c0_i32, %c0_i32_0 : i32, i32
  }
  func.func @transform_2(%arg0: i32) -> (i32, i32) {
    %c0_i32 = arith.constant 0 : i32
    %c0_i32_0 = arith.constant 0 : i32
    %c0_i32_1 = arith.constant 0 : i32
    return %c0_i32, %c0_i32_0 : i32, i32
  }
  func.func @transform_3(%arg0: i32) -> (i32, i32) {
    %c0_i32 = arith.constant 0 : i32
    %c0_i32_0 = arith.constant 0 : i32
    %c0_i32_1 = arith.constant 0 : i32
    return %c0_i32, %c0_i32_0 : i32, i32
  }
  func.func @transform_4(%arg0: i32) -> (i32, i32) {
    %c0_i32 = arith.constant 0 : i32
    %c0_i32_0 = arith.constant 0 : i32
    %c0_i32_1 = arith.constant 0 : i32
    return %c0_i32, %c0_i32_0 : i32, i32
  }
  func.func @transform_5(%arg0: i32) -> (i32, i32) {
    %c0_i32 = arith.constant 0 : i32
    %c0_i32_0 = arith.constant 0 : i32
    %c0_i32_1 = arith.constant 0 : i32
    return %c0_i32, %c0_i32_0 : i32, i32
  }
  func.func @transform_6(%arg0: i32) -> (i32, i32) {
    %c0_i32 = arith.constant 0 : i32
    %c0_i32_0 = arith.constant 0 : i32
    %c0_i32_1 = arith.constant 0 : i32
    return %c0_i32, %c0_i32_0 : i32, i32
  }
  func.func @transform_7(%arg0: i32) -> (i32, i32, i32, i32) {
    %c0_i32 = arith.constant 0 : i32
    %c0_i32_0 = arith.constant 0 : i32
    %c0_i32_1 = arith.constant 0 : i32
    %c0_i32_2 = arith.constant 0 : i32
    return %arg0, %c0_i32, %c0_i32_0, %c0_i32_1 : i32, i32, i32, i32
  }
  func.func @transform_8(%arg0: i32) -> (i32, i32, i32) {
    %c0_i32 = arith.constant 0 : i32
    %c0_i32_0 = arith.constant 0 : i32
    %c0_i32_1 = arith.constant 0 : i32
    return %arg0, %c0_i32, %c0_i32_0 : i32, i32, i32
  }
}

</mosaic_0001>

<llo_original>
// kernel: votepose_voting.1
$region0: #{votepose_voting.1}
  #allocation0 [shape = 'u32[]', space=smem, size = 0x4, offset = 0x4, fixed_abs, tag = 'smem constant byte address 0x4 - core index']
  #allocation1 [shape = 'u32[72,128]{1,0:T(1,128)}', space=vmem, size = 0x9000, scoped, tag = 'internal scratch']
  %s0 = inlined_call_operand.vmem [shape: f32[2,32,128], index: 0, kind: input, shape index: {}]
  %s1 = inlined_call_operand.vmem [shape: f32[32,32], index: 1, kind: input, shape index: {}]
  %s2 = inlined_call_operand.vmem [shape: f32[32,1], index: 2, kind: input, shape index: {}]
  %s3 = inlined_call_operand.vmem [shape: f32[32,32], index: 3, kind: input, shape index: {}]
  %s4 = inlined_call_operand.vmem [shape: f32[32,1], index: 4, kind: input, shape index: {}]
  %s5 = inlined_call_operand.vmem [shape: f32[70,32], index: 5, kind: input, shape index: {}]
  %s6 = inlined_call_operand.vmem [shape: f32[70,1], index: 6, kind: input, shape index: {}]
  %s7 = inlined_call_operand.vmem [shape: f32[2,2,32,128], index: 7, kind: output, shape index: {0}]
  %s8 = inlined_call_operand.vmem [shape: f32[2,6,128], index: 8, kind: output, shape index: {1}]
  %9 = xla_tuple %s7, %s8
  %s10 = sld [smem:[#allocation0]]
  $region69: #{votepose_voting.1} parent=0
    _
  %s12 = ssub.s32 1, %s10
  %s13 = scalar_select 0, %s12, %s10
  loop: start=0, step=1, limit=4
  $region2: #{votepose_voting.1} parent=0 // loop_pre_header
    _
  $region3: #{votepose_voting.1} parent=0 // loop_header
    %s15 = sphi 0, %s19
    %p16 = scmp.ge.s32.totalorder %s15, 4
    %s25 = sphi 0, %s27
    %s28 = sphi 0, %s25
    %s29 = sphi 0, %s28
    %s45 = sphi 0, %s29
    %s49 = sphi 0, %s49
    %s51 = sphi 0, %s49
    %s52 = sphi 0, %s51
    %s66 = sphi 0, %s52
    %s70 = sphi 0, %s70
    %s72 = sphi 0, %s70
    %s73 = sphi 0, %s72
    %s87 = sphi 0, %s73
    %s91 = sphi 0, %s91
    %s93 = sphi 0, %s91
    %s94 = sphi 0, %s93
    %s108 = sphi 0, %s94
    %s112 = sphi 0, %s112
    %s114 = sphi 0, %s112
    %s115 = sphi 0, %s114
    %s129 = sphi 0, %s115
    %s133 = sphi 0, %s133
    %s135 = sphi 0, %s133
    %s136 = sphi 0, %s135
    %s150 = sphi 0, %s136
    %s154 = sphi 0, %s154
    %s156 = sphi 0, %s154
    %s157 = sphi 0, %s156
    %s171 = sphi 0, %s157
    %s177 = sphi 0, %s179
    %s180 = sphi 0, %s177
    %s181 = sphi 0, %s180
    %s197 = sphi 0, %s181
    %s203 = sphi 0, %s205
    %s206 = sphi 0, %s203
    %s207 = sphi 0, %s206
    %s223 = sphi 0, %s207
  $region4: #{votepose_voting.1} parent=0 // loop_header_branch
    %18 = sbr.rel (%p16) target = $region8
  $region5: #{votepose_voting.1} parent=0 // loop_body
    %s20 = ssub.s32 %s15, 1
    %s21 = ssub.s32 %s15, 2
    %s22 = sadd.s32 %s15, 1
    %s23 = ssub.s32 %s15, %s22
    %p24 = scmp.eq.s32.totalorder %s23, 0
    %s26 = sadd.s32 %s25, 1
    %s27 = scalar_select %p24, %s25, %s26
    %p30 = pneg %p24
    %p31 = scmp.eq.s32.totalorder %s15, 1
    %p32 = por %p30, %p31
    %p33 = scmp.ne.s32.totalorder %s25, %s28
    %p34 = scmp.eq.s32.totalorder %s15, 0
    %p35 = por %p33, %p34
    %p36 = scmp.ne.s32.totalorder %s25, %s28
    %p37 = scmp.eq.s32.totalorder %s20, 1
    %p38 = por %p36, %p37
    %p39 = scmp.ne.s32.totalorder %s28, %s29
    %p40 = scmp.eq.s32.totalorder %s20, 0
    %p41 = por %p39, %p40
    %p42 = scmp.ne.s32.totalorder %s28, %s29
    %p43 = scmp.eq.s32.totalorder %s21, 1
    %p44 = por %p42, %p43
    %p46 = scmp.ne.s32.totalorder %s29, %s45
    %p47 = scmp.eq.s32.totalorder %s21, 0
    %p48 = por %p46, %p47
    %s50 = sadd.s32 %s49, 1
    %p53 = scmp.eq.s32.totalorder %s15, 1
    %p54 = scmp.ne.s32.totalorder %s49, %s51
    %p55 = scmp.eq.s32.totalorder %s15, 0
    %p56 = por %p54, %p55
    %p57 = scmp.ne.s32.totalorder %s49, %s51
    %p58 = scmp.eq.s32.totalorder %s20, 1
    %p59 = por %p57, %p58
    %p60 = scmp.ne.s32.totalorder %s51, %s52
    %p61 = scmp.eq.s32.totalorder %s20, 0
    %p62 = por %p60, %p61
    %p63 = scmp.ne.s32.totalorder %s51, %s52
    %p64 = scmp.eq.s32.totalorder %s21, 1
    %p65 = por %p63, %p64
    %p67 = scmp.ne.s32.totalorder %s52, %s66
    %p68 = scmp.eq.s32.totalorder %s21, 0
    %p69 = por %p67, %p68
    %s71 = sadd.s32 %s70, 1
    %p74 = scmp.eq.s32.totalorder %s15, 1
    %p75 = scmp.ne.s32.totalorder %s70, %s72
    %p76 = scmp.eq.s32.totalorder %s15, 0
    %p77 = por %p75, %p76
    %p78 = scmp.ne.s32.totalorder %s70, %s72
    %p79 = scmp.eq.s32.totalorder %s20, 1
    %p80 = por %p78, %p79
    %p81 = scmp.ne.s32.totalorder %s72, %s73
    %p82 = scmp.eq.s32.totalorder %s20, 0
    %p83 = por %p81, %p82
    %p84 = scmp.ne.s32.totalorder %s72, %s73
    %p85 = scmp.eq.s32.totalorder %s21, 1
    %p86 = por %p84, %p85
    %p88 = scmp.ne.s32.totalorder %s73, %s87
    %p89 = scmp.eq.s32.totalorder %s21, 0
    %p90 = por %p88, %p89
    %s92 = sadd.s32 %s91, 1
    %p95 = scmp.eq.s32.totalorder %s15, 1
    %p96 = scmp.ne.s32.totalorder %s91, %s93
    %p97 = scmp.eq.s32.totalorder %s15, 0
    %p98 = por %p96, %p97
    %p99 = scmp.ne.s32.totalorder %s91, %s93
    %p100 = scmp.eq.s32.totalorder %s20, 1
    %p101 = por %p99, %p100
    %p102 = scmp.ne.s32.totalorder %s93, %s94
    %p103 = scmp.eq.s32.totalorder %s20, 0
    %p104 = por %p102, %p103
    %p105 = scmp.ne.s32.totalorder %s93, %s94
    %p106 = scmp.eq.s32.totalorder %s21, 1
    %p107 = por %p105, %p106
    %p109 = scmp.ne.s32.totalorder %s94, %s108
    %p110 = scmp.eq.s32.totalorder %s21, 0
    %p111 = por %p109, %p110
    %s113 = sadd.s32 %s112, 1
    %p116 = scmp.eq.s32.totalorder %s15, 1
    %p117 = scmp.ne.s32.totalorder %s112, %s114
    %p118 = scmp.eq.s32.totalorder %s15, 0
    %p119 = por %p117, %p118
    %p120 = scmp.ne.s32.totalorder %s112, %s114
    %p121 = scmp.eq.s32.totalorder %s20, 1
    %p122 = por %p120, %p121
    %p123 = scmp.ne.s32.totalorder %s114, %s115
    %p124 = scmp.eq.s32.totalorder %s20, 0
    %p125 = por %p123, %p124
    %p126 = scmp.ne.s32.totalorder %s114, %s115
    %p127 = scmp.eq.s32.totalorder %s21, 1
    %p128 = por %p126, %p127
    %p130 = scmp.ne.s32.totalorder %s115, %s129
    %p131 = scmp.eq.s32.totalorder %s21, 0
    %p132 = por %p130, %p131
    %s134 = sadd.s32 %s133, 1
    %p137 = scmp.eq.s32.totalorder %s15, 1
    %p138 = scmp.ne.s32.totalorder %s133, %s135
    %p139 = scmp.eq.s32.totalorder %s15, 0
    %p140 = por %p138, %p139
    %p141 = scmp.ne.s32.totalorder %s133, %s135
    %p142 = scmp.eq.s32.totalorder %s20, 1
    %p143 = por %p141, %p142
    %p144 = scmp.ne.s32.totalorder %s135, %s136
    %p145 = scmp.eq.s32.totalorder %s20, 0
    %p146 = por %p144, %p145
    %p147 = scmp.ne.s32.totalorder %s135, %s136
    %p148 = scmp.eq.s32.totalorder %s21, 1
    %p149 = por %p147, %p148
    %p151 = scmp.ne.s32.totalorder %s136, %s150
    %p152 = scmp.eq.s32.totalorder %s21, 0
    %p153 = por %p151, %p152
    %s155 = sadd.s32 %s154, 1
    %p158 = scmp.eq.s32.totalorder %s15, 1
    %p159 = scmp.ne.s32.totalorder %s154, %s156
    %p160 = scmp.eq.s32.totalorder %s15, 0
    %p161 = por %p159, %p160
    %p162 = scmp.ne.s32.totalorder %s154, %s156
    %p163 = scmp.eq.s32.totalorder %s20, 1
    %p164 = por %p162, %p163
    %p165 = scmp.ne.s32.totalorder %s156, %s157
    %p166 = scmp.eq.s32.totalorder %s20, 0
    %p167 = por %p165, %p166
    %p168 = scmp.ne.s32.totalorder %s156, %s157
    %p169 = scmp.eq.s32.totalorder %s21, 1
    %p170 = por %p168, %p169
    %p172 = scmp.ne.s32.totalorder %s157, %s171
    %p173 = scmp.eq.s32.totalorder %s21, 0
    %p174 = por %p172, %p173
    %s175 = ssub.s32 %s15, %s22
    %p176 = scmp.eq.s32.totalorder %s175, 0
    %s178 = sadd.s32 %s177, 1
    %s179 = scalar_select %p176, %s177, %s178
    %p182 = pneg %p176
    %p183 = scmp.eq.s32.totalorder %s15, 1
    %p184 = por %p182, %p183
    %p185 = scmp.ne.s32.totalorder %s177, %s180
    %p186 = scmp.eq.s32.totalorder %s15, 0
    %p187 = por %p185, %p186
    %p188 = scmp.ne.s32.totalorder %s177, %s180
    %p189 = scmp.eq.s32.totalorder %s20, 1
    %p190 = por %p188, %p189
    %p191 = scmp.ne.s32.totalorder %s180, %s181
    %p192 = scmp.eq.s32.totalorder %s20, 0
    %p193 = por %p191, %p192
    %p194 = scmp.ne.s32.totalorder %s180, %s181
    %p195 = scmp.eq.s32.totalorder %s21, 1
    %p196 = por %p194, %p195
    %p198 = scmp.ne.s32.totalorder %s181, %s197
    %p199 = scmp.eq.s32.totalorder %s21, 0
    %p200 = por %p198, %p199
    %s201 = ssub.s32 %s15, %s22
    %p202 = scmp.eq.s32.totalorder %s201, 0
    %s204 = sadd.s32 %s203, 1
    %s205 = scalar_select %p202, %s203, %s204
    %p208 = pneg %p202
    %p209 = scmp.eq.s32.totalorder %s15, 1
    %p210 = por %p208, %p209
    %p211 = scmp.ne.s32.totalorder %s203, %s206
    %p212 = scmp.eq.s32.totalorder %s15, 0
    %p213 = por %p211, %p212
    %p214 = scmp.ne.s32.totalorder %s203, %s206
    %p215 = scmp.eq.s32.totalorder %s20, 1
    %p216 = por %p214, %p215
    %p217 = scmp.ne.s32.totalorder %s206, %s207
    %p218 = scmp.eq.s32.totalorder %s20, 0
    %p219 = por %p217, %p218
    %p220 = scmp.ne.s32.totalorder %s206, %s207
    %p221 = scmp.eq.s32.totalorder %s21, 1
    %p222 = por %p220, %p221
    %p224 = scmp.ne.s32.totalorder %s207, %s223
    %p225 = scmp.eq.s32.totalorder %s21, 0
    %p226 = por %p224, %p225
    %p227 = scmp.le.s32.totalorder 1, %s15
    %p228 = scmp.lt.s32.totalorder %s15, 3
    %p229 = pnand %p227, %p228
    %p230 = pneg %p229
    // Predicated region
    $region9: #{votepose_voting.1} parent=5 // pred_check
      _
    $region10: #{votepose_voting.1} parent=5 // pred_check_branch
      %232 = sbr.rel (%p229) target = $region12
    $region11: #{votepose_voting.1} parent=5 // pred_region
      %s233 = ssub.s32 %s15, 1
      // Predicated region
      $region13: #{votepose_voting.1} parent=11 // pred_check
        %p234 = pneg %p62
      $region14: #{votepose_voting.1} parent=11 // pred_check_branch
        %236 = sbr.rel (%p234) target = $region16
      $region15: #{votepose_voting.1} parent=11 // pred_region
        _
      $region16: #{votepose_voting.1} parent=11 // pred_fallthru
        _
      // Predicated region
      $region17: #{votepose_voting.1} parent=11 // pred_check
        %p237 = pneg %p83
      $region18: #{votepose_voting.1} parent=11 // pred_check_branch
        %239 = sbr.rel (%p237) target = $region20
      $region19: #{votepose_voting.1} parent=11 // pred_region
        _
      $region20: #{votepose_voting.1} parent=11 // pred_fallthru
        _
      // Predicated region
      $region21: #{votepose_voting.1} parent=11 // pred_check
        %p240 = pneg %p104
      $region22: #{votepose_voting.1} parent=11 // pred_check_branch
        %242 = sbr.rel (%p240) target = $region24
      $region23: #{votepose_voting.1} parent=11 // pred_region
        _
      $region24: #{votepose_voting.1} parent=11 // pred_fallthru
        _
      // Predicated region
      $region25: #{votepose_voting.1} parent=11 // pred_check
        %p243 = pneg %p125
      $region26: #{votepose_voting.1} parent=11 // pred_check_branch
        %245 = sbr.rel (%p243) target = $region28
      $region27: #{votepose_voting.1} parent=11 // pred_region
        _
      $region28: #{votepose_voting.1} parent=11 // pred_fallthru
        _
      // Predicated region
      $region29: #{votepose_voting.1} parent=11 // pred_check
        %p246 = pneg %p146
      $region30: #{votepose_voting.1} parent=11 // pred_check_branch
        %248 = sbr.rel (%p246) target = $region32
      $region31: #{votepose_voting.1} parent=11 // pred_region
        _
      $region32: #{votepose_voting.1} parent=11 // pred_fallthru
        _
      // Predicated region
      $region33: #{votepose_voting.1} parent=11 // pred_check
        %p249 = pneg %p167
      $region34: #{votepose_voting.1} parent=11 // pred_check_branch
        %251 = sbr.rel (%p249) target = $region36
      $region35: #{votepose_voting.1} parent=11 // pred_region
        _
      $region36: #{votepose_voting.1} parent=11 // pred_fallthru
        _
    $region12: #{votepose_voting.1} parent=5 // pred_fallthru
      _
    %p252 = scmp.lt.s32.totalorder %s15, 2
    // Predicated region
    $region37: #{votepose_voting.1} parent=5 // pred_check
      %p253 = pneg %p252
    $region38: #{votepose_voting.1} parent=5 // pred_check_branch
      %255 = sbr.rel (%p253) target = $region40
    $region39: #{votepose_voting.1} parent=5 // pred_region
      // Predicated region
      $region41: #{votepose_voting.1} parent=39 // pred_check
        %p256 = pneg %p35
      $region42: #{votepose_voting.1} parent=39 // pred_check_branch
        %258 = sbr.rel (%p256) target = $region44
      $region43: #{votepose_voting.1} parent=39 // pred_region
        %p259 = scmp.lt.s32.totalorder %s15, 1
        %s260 = scalar_select %p259, %s15, 1
        %s261 = smul.addr %s260, 4
        %s262 = smul.addr %s261, 8
        %s263 = scalar_lea.vmem %s0, %s262
      $region44: #{votepose_voting.1} parent=39 // pred_fallthru
        _
    $region40: #{votepose_voting.1} parent=5 // pred_fallthru
      _
    %p264 = scmp.le.s32.totalorder 1, %s15
    %p265 = scmp.lt.s32.totalorder %s15, 3
    %p266 = pnand %p264, %p265
    %p267 = pneg %p266
    // Predicated region
    $region45: #{votepose_voting.1} parent=5 // pred_check
      _
    $region46: #{votepose_voting.1} parent=5 // pred_check_branch
      %269 = sbr.rel (%p266) target = $region48
    $region47: #{votepose_voting.1} parent=5 // pred_region
      %s270 = ssub.s32 %s15, 1
      %p271 = scmp.lt.s32.totalorder %s20, 1
      %s272 = scalar_select %p271, %s20, 1
      %s273 = smul.addr %s272, 4
      %s274 = smul.addr %s273, 8
      %s275 = scalar_lea.vmem %s0, %s274
      %p276 = pneg %p41
      %p277 = pneg %p38
      %p278 = pneg %p62
      %p279 = pneg %p59
      %p280 = pneg %p83
      %p281 = pneg %p80
      %p282 = pneg %p104
      %p283 = pneg %p101
      %p284 = pneg %p125
      %p285 = pneg %p122
      %p286 = pneg %p146
      %p287 = pneg %p143
      %p288 = pneg %p167
      %p289 = pneg %p164
      %p290 = pneg %p193
      %p291 = pneg %p190
      %p292 = scmp.lt.s32.totalorder %s20, 1
      %s293 = scalar_select %p292, %s20, 1
      %s294 = smul.addr %s293, 8
      %s295 = smul.addr %s294, 8
      %s296 = scalar_lea.vmem %s7, %s295
      %p297 = pneg %p219
      %p298 = pneg %p216
      %p299 = scmp.lt.s32.totalorder %s20, 1
      %s300 = scalar_select %p299, %s20, 1
      %s301 = smul.addr %s300, 8
      %s302 = scalar_lea.vmem %s8, %s301
      %p303 = scmp.lt.s32.totalorder %s20, 1
      %s304 = scalar_select %p303, %s20, 1
      %s305 = smul.addr %s304, 4
      %s306 = smul.addr %s305, 8
      %s307 = scalar_lea.vmem %s0, %s306
      %p308 = scmp.lt.s32.totalorder %s20, 1
      %s309 = scalar_select %p308, %s20, 1
      %s310 = smul.addr %s309, 8
      %s311 = smul.addr %s310, 8
      %s312 = scalar_lea.vmem %s7, %s311
      %p313 = scmp.lt.s32.totalorder %s20, 1
      %s314 = scalar_select %p313, %s20, 1
      %s315 = smul.addr %s314, 8
      %s316 = scalar_lea.vmem %s8, %s315
      %v317 = vld [vmem:[%s307] sm:$0xff]
      %v318 = vld [vmem:[%s307 + $0x8] sm:$0xff]
      %v319 = vld [vmem:[%s307 + $0x10] sm:$0xff]
      %v320 = vld [vmem:[%s307 + $0x18] sm:$0xff]
      %v321 = vld [vmem:[%s1] sm:$0xff]
      %v322 = vld [vmem:[%s1 + $0x8] sm:$0xff]
      %v323 = vld [vmem:[%s1 + $0x10] sm:$0xff]
      %v324 = vld [vmem:[%s1 + $0x18] sm:$0xff]
      %v325 = vld [vmem:[%s2] sm:$0xff]
      %v326 = vld [vmem:[%s2 + $0x8] sm:$0xff]
      %v327 = vld [vmem:[%s2 + $0x10] sm:$0xff]
      %v328 = vld [vmem:[%s2 + $0x18] sm:$0xff]
      %330 = vset.pattern.permute.xlu0 0
      %331 = vperm.xlu0 %330, %v325
      %v332 = vpop.permute.xlu0 %331
      %335 = vset.pattern.permute.xlu0 0
      %336 = vperm.xlu0 %335, %v326
      %v337 = vpop.permute.xlu0 %336
      %340 = vset.pattern.permute.xlu0 0
      %341 = vperm.xlu0 %340, %v327
      %v342 = vpop.permute.xlu0 %341
      %345 = vset.pattern.permute.xlu0 0
      %346 = vperm.xlu0 %345, %v328
      %v347 = vpop.permute.xlu0 %346
      %vm349 = vcmask 261120
      %v351 = vsel %vm349, %v321, 0
      %v354 = vsel %vm349, %v322, 0
      %v357 = vsel %vm349, %v323, 0
      %v360 = vsel %vm349, %v324, 0
      %362 = vmatpush.msra.mxu0 0.0
      %363 = vmatpush.msra.mxu0 0.0
      %364 = vmatpush.msra.mxu0 0.0
      %365 = vmatpush.msra.mxu0 0.0
      %366 = vmatpush.msra.mxu0 0.0
      %367 = vmatpush.msra.mxu0 0.0
      %368 = vmatpush.msra.mxu0 0.0
      %369 = vmatpush.msra.mxu0 0.0
      %370 = vmatpush.msra.mxu0 0.0
      %371 = vmatpush.msra.mxu0 0.0
      %372 = vmatpush.msra.mxu0 0.0
      %373 = vmatpush.msra.mxu0 0.0
      %374 = vmatpush.msra.mxu0 %v320
      %375 = vmatpush.msra.mxu0 %v319
      %376 = vmatpush.msra.mxu0 %v318
      %377 = vmatpush.msra.mxu0 %v317
      %378 = vmatmul.f32.gmra.mxu0 %v351
      %v379 = vpop.f32.mrf.mxu0
      %v380 = vadd.f32 %v332, %v379
      %381 = vmatmul.f32.gmra.mxu0 %v354
      %v382 = vpop.f32.mrf.mxu0
      %v383 = vadd.f32 %v337, %v382
      %384 = vmatmul.f32.gmra.mxu0 %v357
      %v385 = vpop.f32.mrf.mxu0
      %v386 = vadd.f32 %v342, %v385
      %387 = vmatmul.f32.gmra.mxu0 %v360
      %v388 = vpop.f32.mrf.mxu0
      %v389 = vadd.f32 %v347, %v388
      %390 = vdwg.mxu0
      %v391 = vmax.f32 %v380, 0.0
      %v392 = vmax.f32 %v383, 0.0
      %v393 = vmax.f32 %v386, 0.0
      %v394 = vmax.f32 %v389, 0.0
      %v395 = vld [vmem:[%s3] sm:$0xff]
      %v396 = vld [vmem:[%s3 + $0x8] sm:$0xff]
      %v397 = vld [vmem:[%s3 + $0x10] sm:$0xff]
      %v398 = vld [vmem:[%s3 + $0x18] sm:$0xff]
      %v399 = vld [vmem:[%s4] sm:$0xff]
      %v400 = vld [vmem:[%s4 + $0x8] sm:$0xff]
      %v401 = vld [vmem:[%s4 + $0x10] sm:$0xff]
      %v402 = vld [vmem:[%s4 + $0x18] sm:$0xff]
      %404 = vset.pattern.permute.xlu0 0
      %405 = vperm.xlu0 %404, %v399
      %v406 = vpop.permute.xlu0 %405
      %409 = vset.pattern.permute.xlu0 0
      %410 = vperm.xlu0 %409, %v400
      %v411 = vpop.permute.xlu0 %410
      %414 = vset.pattern.permute.xlu0 0
      %415 = vperm.xlu0 %414, %v401
      %v416 = vpop.permute.xlu0 %415
      %419 = vset.pattern.permute.xlu0 0
      %420 = vperm.xlu0 %419, %v402
      %v421 = vpop.permute.xlu0 %420
      %v424 = vsel %vm349, %v395, 0
      %v427 = vsel %vm349, %v396, 0
      %v430 = vsel %vm349, %v397, 0
      %v433 = vsel %vm349, %v398, 0
      %435 = vmatpush.msra.mxu0 0.0
      %436 = vmatpush.msra.mxu0 0.0
      %437 = vmatpush.msra.mxu0 0.0
      %438 = vmatpush.msra.mxu0 0.0
      %439 = vmatpush.msra.mxu0 0.0
      %440 = vmatpush.msra.mxu0 0.0
      %441 = vmatpush.msra.mxu0 0.0
      %442 = vmatpush.msra.mxu0 0.0
      %443 = vmatpush.msra.mxu0 0.0
      %444 = vmatpush.msra.mxu0 0.0
      %445 = vmatpush.msra.mxu0 0.0
      %446 = vmatpush.msra.mxu0 0.0
      %447 = vmatpush.msra.mxu0 %v394
      %448 = vmatpush.msra.mxu0 %v393
      %449 = vmatpush.msra.mxu0 %v392
      %450 = vmatpush.msra.mxu0 %v391
      %451 = vmatmul.f32.gmra.mxu0 %v424
      %v452 = vpop.f32.mrf.mxu0
      %v453 = vadd.f32 %v406, %v452
      %454 = vmatmul.f32.gmra.mxu0 %v427
      %v455 = vpop.f32.mrf.mxu0
      %v456 = vadd.f32 %v411, %v455
      %457 = vmatmul.f32.gmra.mxu0 %v430
      %v458 = vpop.f32.mrf.mxu0
      %v459 = vadd.f32 %v416, %v458
      %460 = vmatmul.f32.gmra.mxu0 %v433
      %v461 = vpop.f32.mrf.mxu0
      %v462 = vadd.f32 %v421, %v461
      %463 = vdwg.mxu0
      %v464 = vmax.f32 %v453, 0.0
      %v465 = vmax.f32 %v456, 0.0
      %v466 = vmax.f32 %v459, 0.0
      %v467 = vmax.f32 %v462, 0.0
      %v468 = vld [vmem:[%s5] sm:$0xff]
      %v469 = vld [vmem:[%s5 + $0x8] sm:$0xff]
      %v470 = vld [vmem:[%s5 + $0x10] sm:$0xff]
      %v471 = vld [vmem:[%s5 + $0x18] sm:$0xff]
      %v472 = vld [vmem:[%s5 + $0x20] sm:$0xff]
      %v473 = vld [vmem:[%s5 + $0x28] sm:$0xff]
      %v474 = vld [vmem:[%s5 + $0x30] sm:$0xff]
      %v475 = vld [vmem:[%s5 + $0x38] sm:$0xff]
      %v476 = vld [vmem:[%s5 + $0x40] sm:$0x3f]
      %v477 = vld [vmem:[%s6] sm:$0xff]
      %v478 = vld [vmem:[%s6 + $0x8] sm:$0xff]
      %v479 = vld [vmem:[%s6 + $0x10] sm:$0xff]
      %v480 = vld [vmem:[%s6 + $0x18] sm:$0xff]
      %v481 = vld [vmem:[%s6 + $0x20] sm:$0xff]
      %v482 = vld [vmem:[%s6 + $0x28] sm:$0xff]
      %v483 = vld [vmem:[%s6 + $0x30] sm:$0xff]
      %v484 = vld [vmem:[%s6 + $0x38] sm:$0xff]
      %v485 = vld [vmem:[%s6 + $0x40] sm:$0x3f]
      %487 = vset.pattern.permute.xlu0 0
      %488 = vperm.xlu0 %487, %v477
      %v489 = vpop.permute.xlu0 %488
      %492 = vset.pattern.permute.xlu0 0
      %493 = vperm.xlu0 %492, %v478
      %v494 = vpop.permute.xlu0 %493
      %497 = vset.pattern.permute.xlu0 0
      %498 = vperm.xlu0 %497, %v479
      %v499 = vpop.permute.xlu0 %498
      %502 = vset.pattern.permute.xlu0 0
      %503 = vperm.xlu0 %502, %v480
      %v504 = vpop.permute.xlu0 %503
      %507 = vset.pattern.permute.xlu0 0
      %508 = vperm.xlu0 %507, %v481
      %v509 = vpop.permute.xlu0 %508
      %512 = vset.pattern.permute.xlu0 0
      %513 = vperm.xlu0 %512, %v482
      %v514 = vpop.permute.xlu0 %513
      %517 = vset.pattern.permute.xlu0 0
      %518 = vperm.xlu0 %517, %v483
      %v519 = vpop.permute.xlu0 %518
      %522 = vset.pattern.permute.xlu0 0
      %523 = vperm.xlu0 %522, %v484
      %v524 = vpop.permute.xlu0 %523
      %527 = vset.pattern.permute.xlu0 0
      %528 = vperm.xlu0 %527, %v485
      %v529 = vpop.permute.xlu0 %528
      %v532 = vsel %vm349, %v468, 0
      %v535 = vsel %vm349, %v469, 0
      %v538 = vsel %vm349, %v470, 0
      %v541 = vsel %vm349, %v471, 0
      %v544 = vsel %vm349, %v472, 0
      %v547 = vsel %vm349, %v473, 0
      %v550 = vsel %vm349, %v474, 0
      %v553 = vsel %vm349, %v475, 0
      %v556 = vsel %vm349, %v476, 0
      %558 = vmatpush.msra.mxu0 0.0
      %559 = vmatpush.msra.mxu0 0.0
      %560 = vmatpush.msra.mxu0 0.0
      %561 = vmatpush.msra.mxu0 0.0
      %562 = vmatpush.msra.mxu0 0.0
      %563 = vmatpush.msra.mxu0 0.0
      %564 = vmatpush.msra.mxu0 0.0
      %565 = vmatpush.msra.mxu0 0.0
      %566 = vmatpush.msra.mxu0 0.0
      %567 = vmatpush.msra.mxu0 0.0
      %568 = vmatpush.msra.mxu0 0.0
      %569 = vmatpush.msra.mxu0 0.0
      %570 = vmatpush.msra.mxu0 %v467
      %571 = vmatpush.msra.mxu0 %v466
      %572 = vmatpush.msra.mxu0 %v465
      %573 = vmatpush.msra.mxu0 %v464
      %574 = vmatmul.f32.gmra.mxu0 %v532
      %v575 = vpop.f32.mrf.mxu0
      %v576 = vadd.f32 %v489, %v575
      %577 = vmatmul.f32.gmra.mxu0 %v535
      %v578 = vpop.f32.mrf.mxu0
      %v579 = vadd.f32 %v494, %v578
      %580 = vmatmul.f32.gmra.mxu0 %v538
      %v581 = vpop.f32.mrf.mxu0
      %v582 = vadd.f32 %v499, %v581
      %583 = vmatmul.f32.gmra.mxu0 %v541
      %v584 = vpop.f32.mrf.mxu0
      %v585 = vadd.f32 %v504, %v584
      %586 = vmatmul.f32.gmra.mxu0 %v544
      %v587 = vpop.f32.mrf.mxu0
      %v588 = vadd.f32 %v509, %v587
      %589 = vmatmul.f32.gmra.mxu0 %v547
      %v590 = vpop.f32.mrf.mxu0
      %v591 = vadd.f32 %v514, %v590
      %592 = vmatmul.f32.gmra.mxu0 %v550
      %v593 = vpop.f32.mrf.mxu0
      %v594 = vadd.f32 %v519, %v593
      %595 = vmatmul.f32.gmra.mxu0 %v553
      %v596 = vpop.f32.mrf.mxu0
      %v597 = vadd.f32 %v524, %v596
      %598 = vmatmul.f32.gmra.mxu0 %v556
      %v599 = vpop.f32.mrf.mxu0
      %v600 = vadd.f32 %v529, %v599
      %601 = vdwg.mxu0
      %v602 = vadd.f32 %v317, %v576
      %v603 = vadd.f32 %v318, %v579
      %v604 = vadd.f32 %v319, %v582
      %v605 = vadd.f32 %v320, %v585
      %v606 = vadd.f32 %v317, %v588
      %v607 = vadd.f32 %v318, %v591
      %v608 = vadd.f32 %v319, %v594
      %v609 = vadd.f32 %v320, %v597
      %610 = vst [vmem:[%s312] sm:$0xff] %v602
      %611 = vst [vmem:[%s312 + $0x8] sm:$0xff] %v603
      %612 = vst [vmem:[%s312 + $0x10] sm:$0xff] %v604
      %613 = vst [vmem:[%s312 + $0x18] sm:$0xff] %v605
      %614 = vst [vmem:[%s312 + $0x20] sm:$0xff] %v606
      %615 = vst [vmem:[%s312 + $0x28] sm:$0xff] %v607
      %616 = vst [vmem:[%s312 + $0x30] sm:$0xff] %v608
      %617 = vst [vmem:[%s312 + $0x38] sm:$0xff] %v609
      %618 = vst [vmem:[%s316] sm:$0x3f] %v600
      %p619 = scmp.lt.s32.totalorder %s20, 1
      %s620 = scalar_select %p619, %s20, 1
      %s621 = smul.addr %s620, 8
      %s622 = smul.addr %s621, 8
      %s623 = scalar_lea.vmem %s7, %s622
      %p624 = scmp.lt.s32.totalorder %s20, 1
      %s625 = scalar_select %p624, %s20, 1
      %s626 = smul.addr %s625, 8
      %s627 = scalar_lea.vmem %s8, %s626
      // Predicated region
      $region49: #{votepose_voting.1} parent=47 // pred_check
        %p628 = pneg %p190
      $region50: #{votepose_voting.1} parent=47 // pred_check_branch
        %630 = sbr.rel (%p628) target = $region52
      $region51: #{votepose_voting.1} parent=47 // pred_region
        _
      $region52: #{votepose_voting.1} parent=47 // pred_fallthru
        _
      // Predicated region
      $region53: #{votepose_voting.1} parent=47 // pred_check
        %p631 = pneg %p216
      $region54: #{votepose_voting.1} parent=47 // pred_check_branch
        %633 = sbr.rel (%p631) target = $region56
      $region55: #{votepose_voting.1} parent=47 // pred_region
        _
      $region56: #{votepose_voting.1} parent=47 // pred_fallthru
        _
    $region48: #{votepose_voting.1} parent=5 // pred_fallthru
      _
    %p634 = scmp.le.s32.totalorder 2, %s15
    // Predicated region
    $region57: #{votepose_voting.1} parent=5 // pred_check
      %p635 = pneg %p634
    $region58: #{votepose_voting.1} parent=5 // pred_check_branch
      %637 = sbr.rel (%p635) target = $region60
    $region59: #{votepose_voting.1} parent=5 // pred_region
      %s638 = ssub.s32 %s15, 2
      // Predicated region
      $region61: #{votepose_voting.1} parent=59 // pred_check
        %p639 = pneg %p196
      $region62: #{votepose_voting.1} parent=59 // pred_check_branch
        %641 = sbr.rel (%p639) target = $region64
      $region63: #{votepose_voting.1} parent=59 // pred_region
        %p642 = scmp.lt.s32.totalorder %s21, 1
        %s643 = scalar_select %p642, %s21, 1
        %s644 = smul.addr %s643, 8
        %s645 = smul.addr %s644, 8
        %s646 = scalar_lea.vmem %s7, %s645
      $region64: #{votepose_voting.1} parent=59 // pred_fallthru
        _
      // Predicated region
      $region65: #{votepose_voting.1} parent=59 // pred_check
        %p647 = pneg %p222
      $region66: #{votepose_voting.1} parent=59 // pred_check_branch
        %649 = sbr.rel (%p647) target = $region68
      $region67: #{votepose_voting.1} parent=59 // pred_region
        %p650 = scmp.lt.s32.totalorder %s21, 1
        %s651 = scalar_select %p650, %s21, 1
        %s652 = smul.addr %s651, 8
        %s653 = scalar_lea.vmem %s8, %s652
      $region68: #{votepose_voting.1} parent=59 // pred_fallthru
        _
    $region60: #{votepose_voting.1} parent=5 // pred_fallthru
      _
  $region6: #{votepose_voting.1} parent=0 // loop_footer
    %s19 = sadd.s32 1, %s15
  $region7: #{votepose_voting.1} parent=0 // loop_footer_branch
    %14 = sbr.rel target = $region3
  $region8: #{votepose_voting.1} parent=0 // loop_exit
    _

</llo_original>
